<compile_context>
chip_gen: v6e
topology: v6e:2x2x1
jax: 0.10.0
libtpu: 0.0.40
codegen_flags: <defaults>
</compile_context>

<pallas_src>
import jax
import jax.numpy as jnp
from jax.experimental import pallas as pl
from jax.experimental.pallas import tpu as pltpu

LANE = 128
SUB = 8  # sublane rows processed per inner-loop step (one f32 vreg tall)


def dice_count_kernel(x_ref, t_ref, out_ref):
    """Accumulate per-class raw counts for one batch image, one N-tile at a time.

    x_ref:   (C, TILE_R, 128) logits, input dtype.
    t_ref:   (TILE_R, 128) int32 labels.
    out_ref: (2, C-1, 8, 128) f32 accumulators (resident across the tile axis):
             out[0, c-1] accumulates (target==c & pred==c), out[1, c-1] (target==c).
    """
    num_classes = x_ref.shape[0]
    tile_r = x_ref.shape[1]

    # Zero the per-batch accumulators at the first tile of this batch image.
    @pl.when(pl.program_id(1) == 0)
    def _init():
        out_ref[...] = jnp.zeros_like(out_ref)

    def body(j, carry):
        r0 = pl.multiple_of(j * SUB, SUB)
        t_blk = t_ref[pl.ds(r0, SUB), :]                       # (8,128) int32

        # Channel argmax (first-max tie-breaking, matching torch.max / argmax).
        best_val = x_ref[0, pl.ds(r0, SUB), :]                 # (8,128) input dtype
        best_idx = jnp.zeros((SUB, LANE), jnp.int32)
        for c in range(1, num_classes):
            v = x_ref[c, pl.ds(r0, SUB), :]
            take = v > best_val
            best_val = jnp.where(take, v, best_val)
            best_idx = jnp.where(take, jnp.int32(c), best_idx)

        # (pred == c & target == c)  ==  (target == c & pred == target)
        match = best_idx == t_blk
        for c in range(1, num_classes):
            tgt_c = t_blk == c
            out_ref[0, c - 1] += jnp.logical_and(tgt_c, match).astype(jnp.float32)
            out_ref[1, c - 1] += tgt_c.astype(jnp.float32)
        return carry

    n_sub = tile_r // SUB
    jax.lax.fori_loop(0, n_sub, body, 0, unroll=min(4, n_sub))


def dice_loss(input2, target1, eps=1e-8, *, block_bytes=4 * 1024 * 1024):
    """input2: (B, C, H, W) float logits, target1: (B, H, W) integer labels."""
    B, C, H, W = input2.shape
    assert C >= 2, "DiceLoss needs at least one foreground class"
    num_fg = C - 1
    M = H * W

    # Free reshapes only: keep the logits dtype (no f32 upcast / no HBM copy).
    x = input2.reshape(B, C, M)
    t = target1.reshape(B, M).astype(jnp.int32)

    # Tile sizing: lane-dense rows of 128; TILE_R multiple of 8, ~4 MiB logits
    # block (fits v7x 64 MiB VMEM double-buffered with plenty of headroom).
    rows = -(-M // LANE)
    itemsize = jnp.dtype(x.dtype).itemsize
    bytes_per_row = C * LANE * itemsize + LANE * 4          # x rows + t row
    tile_r = max(SUB, min(1024, (block_bytes // bytes_per_row) // SUB * SUB))
    tile_r = min(tile_r, -(-rows // SUB) * SUB)             # don't over-pad tiny inputs
    rows_pad = -(-rows // tile_r) * tile_r
    m_pad = rows_pad * LANE

    if m_pad != M:
        # Pad labels with 0 (background, excluded from every class count), so
        # padded elements contribute nothing regardless of the padded logits.
        x = jnp.pad(x, ((0, 0), (0, 0), (0, m_pad - M)))
        t = jnp.pad(t, ((0, 0), (0, m_pad - M)))

    x = x.reshape(B, C, rows_pad, LANE)
    t = t.reshape(B, rows_pad, LANE)
    tiles = rows_pad // tile_r

    counts = pl.pallas_call(
        dice_count_kernel,
        out_shape=jax.ShapeDtypeStruct((B, 2, num_fg, SUB, LANE), jnp.float32),
        grid=(B, tiles),
        in_specs=[
            pl.BlockSpec((None, C, tile_r, LANE), lambda b, i: (b, 0, i, 0)),
            pl.BlockSpec((None, tile_r, LANE), lambda b, i: (b, i, 0)),
        ],
        out_specs=pl.BlockSpec(
            (None, 2, num_fg, SUB, LANE), lambda b, i: (b, 0, 0, 0, 0)
        ),
        compiler_params=pltpu.CompilerParams(
            dimension_semantics=("parallel", "arbitrary"),
            vmem_limit_bytes=48 * 1024 * 1024,
        ),
    )(x, t)

    # Finalize in the wrapper: sum raw counts over batches and vreg lanes first,
    # then apply eps / divide / mean (dice is non-linear in the counts).
    totals = jnp.sum(counts, axis=(0, 3, 4))                # (2, C-1)
    inter, bsum = totals[0], totals[1]
    dice = (2.0 * inter + eps) / (inter + bsum + eps)
    return (1.0 - jnp.mean(dice)).reshape(1).astype(jnp.float32)


def _reference(input2, target1, eps=1e-8):
    # Pure-JAX reference of the exact PyTorch semantics, for validation only.
    B, C, H, W = input2.shape
    pred = jnp.argmax(input2, axis=1).reshape(B, -1)
    tgt = target1.reshape(B, -1)
    vals = []
    for c in range(1, C):
        inter = jnp.sum((tgt == c) & (pred == c)).astype(jnp.float32)
        b_sum = jnp.sum(tgt == c).astype(jnp.float32)
        vals.append((2.0 * inter + eps) / (inter + b_sum + eps))
    return jnp.array([1.0 - jnp.mean(jnp.stack(vals))], dtype=jnp.float32)


if __name__ == "__main__":
    B, C, H, W = 2, 4, 16, 16
    key = jax.random.PRNGKey(0)
    k_logit, k_tgt = jax.random.split(key)
    input2 = jax.random.normal(k_logit, (B, C, H, W), dtype=jnp.float32)
    target1 = jax.random.randint(k_tgt, (B, H, W), 0, C, dtype=jnp.int32)

    loss = jax.block_until_ready(dice_loss(input2, target1))

    ref = _reference(input2, target1)
    assert loss.shape == (1,)
    assert jnp.allclose(loss, ref, atol=1e-6, rtol=1e-6), (loss, ref)

    print("KERNEL_OK")
</pallas_src>

<mosaic_0001>
module attributes {stable_mosaic.version = 11 : i64} {
  func.func @dice_count_kernel(%arg0: i32, %arg1: i32, %arg2: memref<1x4x8x128xf32, #tpu.memory_space<vmem>>, %arg3: memref<1x8x128xi32, #tpu.memory_space<vmem>>, %arg4: memref<1x2x3x8x128xf32, #tpu.memory_space<vmem>>) attributes {dimension_semantics = [#tpu.dimension_semantics<parallel>, #tpu.dimension_semantics<arbitrary>], iteration_bounds = array<i64: 2, 1>, scalar_prefetch = 0 : i64, scratch_operands = 0 : i64, tpu.core_type = #tpu.core_type<tc>, window_params = [{transform_indices = @transform_0, window_bounds = array<i64: 1, 4, 8, 128>}, {transform_indices = @transform_1, window_bounds = array<i64: 1, 8, 128>}, {transform_indices = @transform_2, window_bounds = array<i64: 1, 2, 3, 8, 128>}]} {
    %c0_i32 = arith.constant 0 : i32
    %0 = arith.cmpi eq, %arg1, %c0_i32 : i32
    %1 = arith.extui %0 : i1 to i32
    %c0_i32_0 = arith.constant 0 : i32
    %2 = arith.cmpi ne, %1, %c0_i32_0 : i32
    scf.if %2 {
      %cst = arith.constant 0.000000e+00 : f32
      %90 = vector.broadcast %cst : f32 to vector<2x3x8x128xf32>
      %c0_77 = arith.constant 0 : index
      %c0_78 = arith.constant 0 : index
      %c0_79 = arith.constant 0 : index
      %c0_80 = arith.constant 0 : index
      %c0_81 = arith.constant 0 : index
      %91 = vector.load %arg4[%c0_77, %c0_78, %c0_79, %c0_80, %c0_81] : memref<1x2x3x8x128xf32, #tpu.memory_space<vmem>>, vector<1x2x3x8x128xf32>
      %92 = vector.shape_cast %91 : vector<1x2x3x8x128xf32> to vector<2x3x8x128xf32>
      %93 = vector.shape_cast %90 : vector<2x3x8x128xf32> to vector<1x2x3x8x128xf32>
      tpu.vector_store %arg4[%c0_77, %c0_78, %c0_79, %c0_80, %c0_81], %93 {strides = array<i32>} : memref<1x2x3x8x128xf32, #tpu.memory_space<vmem>>, vector<1x2x3x8x128xf32>,
    } else {
    }
    %c0_i32_1 = arith.constant 0 : i32
    %c8_i32 = arith.constant 8 : i32
    %3 = arith.muli %c0_i32_1, %c8_i32 : i32
    %4 = tpu.assume_multiple %3, 8 : i32
    %c0 = arith.constant 0 : index
    %5 = arith.index_cast %4 : i32 to index
    %c0_2 = arith.constant 0 : index
    %6 = vector.load %arg3[%c0, %5, %c0_2] : memref<1x8x128xi32, #tpu.memory_space<vmem>>, vector<1x8x128xi32>
    %7 = vector.shape_cast %6 : vector<1x8x128xi32> to vector<8x128xi32>
    %c0_3 = arith.constant 0 : index
    %c0_4 = arith.constant 0 : index
    %8 = arith.index_cast %4 : i32 to index
    %c0_5 = arith.constant 0 : index
    %9 = vector.load %arg2[%c0_3, %c0_4, %8, %c0_5] : memref<1x4x8x128xf32, #tpu.memory_space<vmem>>, vector<1x1x8x128xf32>
    %10 = vector.shape_cast %9 : vector<1x1x8x128xf32> to vector<8x128xf32>
    %c0_i32_6 = arith.constant 0 : i32
    %11 = vector.broadcast %c0_i32_6 : i32 to vector<8x128xi32>
    %c0_7 = arith.constant 0 : index
    %c1 = arith.constant 1 : index
    %12 = arith.index_cast %4 : i32 to index
    %c0_8 = arith.constant 0 : index
    %13 = vector.load %arg2[%c0_7, %c1, %12, %c0_8] : memref<1x4x8x128xf32, #tpu.memory_space<vmem>>, vector<1x1x8x128xf32>
    %14 = vector.shape_cast %13 : vector<1x1x8x128xf32> to vector<8x128xf32>
    %15 = arith.cmpf ogt, %14, %10 : vector<8x128xf32>
    %16 = arith.select %15, %14, %10 : vector<8x128xi1>, vector<8x128xf32>
    %c1_i32 = arith.constant 1 : i32
    %17 = vector.broadcast %c1_i32 : i32 to vector<8x128xi32>
    %18 = arith.select %15, %17, %11 : vector<8x128xi1>, vector<8x128xi32>
    %c0_9 = arith.constant 0 : index
    %c2 = arith.constant 2 : index
    %19 = arith.index_cast %4 : i32 to index
    %c0_10 = arith.constant 0 : index
    %20 = vector.load %arg2[%c0_9, %c2, %19, %c0_10] : memref<1x4x8x128xf32, #tpu.memory_space<vmem>>, vector<1x1x8x128xf32>
    %21 = vector.shape_cast %20 : vector<1x1x8x128xf32> to vector<8x128xf32>
    %22 = arith.cmpf ogt, %21, %16 : vector<8x128xf32>
    %23 = arith.select %22, %21, %16 : vector<8x128xi1>, vector<8x128xf32>
    %c2_i32 = arith.constant 2 : i32
    %24 = vector.broadcast %c2_i32 : i32 to vector<8x128xi32>
    %25 = arith.select %22, %24, %18 : vector<8x128xi1>, vector<8x128xi32>
    %c0_11 = arith.constant 0 : index
    %c3 = arith.constant 3 : index
    %26 = arith.index_cast %4 : i32 to index
    %c0_12 = arith.constant 0 : index
    %27 = vector.load %arg2[%c0_11, %c3, %26, %c0_12] : memref<1x4x8x128xf32, #tpu.memory_space<vmem>>, vector<1x1x8x128xf32>
    %28 = vector.shape_cast %27 : vector<1x1x8x128xf32> to vector<8x128xf32>
    %29 = arith.cmpf ogt, %28, %23 : vector<8x128xf32>
    %c3_i32 = arith.constant 3 : i32
    %30 = vector.broadcast %c3_i32 : i32 to vector<8x128xi32>
    %31 = arith.select %29, %30, %25 : vector<8x128xi1>, vector<8x128xi32>
    %32 = arith.cmpi eq, %31, %7 : vector<8x128xi32>
    %c1_i32_13 = arith.constant 1 : i32
    %33 = vector.broadcast %c1_i32_13 : i32 to vector<8x128xi32>
    %34 = arith.cmpi eq, %7, %33 : vector<8x128xi32>
    %c0_14 = arith.constant 0 : index
    %c0_15 = arith.constant 0 : index
    %c0_16 = arith.constant 0 : index
    %c0_17 = arith.constant 0 : index
    %c0_18 = arith.constant 0 : index
    %35 = vector.load %arg4[%c0_14, %c0_15, %c0_16, %c0_17, %c0_18] : memref<1x2x3x8x128xf32, #tpu.memory_space<vmem>>, vector<1x1x1x8x128xf32>
    %36 = vector.shape_cast %35 : vector<1x1x1x8x128xf32> to vector<8x128xf32>
    %37 = arith.andi %34, %32 : vector<8x128xi1>
    %38 = arith.extui %37 : vector<8x128xi1> to vector<8x128xi32>
    %39 = arith.sitofp %38 : vector<8x128xi32> to vector<8x128xf32>
    %40 = arith.addf %36, %39 : vector<8x128xf32>
    %c0_19 = arith.constant 0 : index
    %c0_20 = arith.constant 0 : index
    %c0_21 = arith.constant 0 : index
    %c0_22 = arith.constant 0 : index
    %c0_23 = arith.constant 0 : index
    %41 = vector.load %arg4[%c0_19, %c0_20, %c0_21, %c0_22, %c0_23] : memref<1x2x3x8x128xf32, #tpu.memory_space<vmem>>, vector<1x1x1x8x128xf32>
    %42 = vector.shape_cast %41 : vector<1x1x1x8x128xf32> to vector<8x128xf32>
    %43 = vector.shape_cast %40 : vector<8x128xf32> to vector<1x1x1x8x128xf32>
    tpu.vector_store %arg4[%c0_19, %c0_20, %c0_21, %c0_22, %c0_23], %43 {strides = array<i32>} : memref<1x2x3x8x128xf32, #tpu.memory_space<vmem>>, vector<1x1x1x8x128xf32>,
    %c0_24 = arith.constant 0 : index
    %c1_25 = arith.constant 1 : index
    %c0_26 = arith.constant 0 : index
    %c0_27 = arith.constant 0 : index
    %c0_28 = arith.constant 0 : index
    %44 = vector.load %arg4[%c0_24, %c1_25, %c0_26, %c0_27, %c0_28] : memref<1x2x3x8x128xf32, #tpu.memory_space<vmem>>, vector<1x1x1x8x128xf32>
    %45 = vector.shape_cast %44 : vector<1x1x1x8x128xf32> to vector<8x128xf32>
    %46 = arith.extui %34 : vector<8x128xi1> to vector<8x128xi32>
    %47 = arith.sitofp %46 : vector<8x128xi32> to vector<8x128xf32>
    %48 = arith.addf %45, %47 : vector<8x128xf32>
    %c0_29 = arith.constant 0 : index
    %c1_30 = arith.constant 1 : index
    %c0_31 = arith.constant 0 : index
    %c0_32 = arith.constant 0 : index
    %c0_33 = arith.constant 0 : index
    %49 = vector.load %arg4[%c0_29, %c1_30, %c0_31, %c0_32, %c0_33] : memref<1x2x3x8x128xf32, #tpu.memory_space<vmem>>, vector<1x1x1x8x128xf32>
    %50 = vector.shape_cast %49 : vector<1x1x1x8x128xf32> to vector<8x128xf32>
    %51 = vector.shape_cast %48 : vector<8x128xf32> to vector<1x1x1x8x128xf32>
    tpu.vector_store %arg4[%c0_29, %c1_30, %c0_31, %c0_32, %c0_33], %51 {strides = array<i32>} : memref<1x2x3x8x128xf32, #tpu.memory_space<vmem>>, vector<1x1x1x8x128xf32>,
    %c2_i32_34 = arith.constant 2 : i32
    %52 = vector.broadcast %c2_i32_34 : i32 to vector<8x128xi32>
    %53 = arith.cmpi eq, %7, %52 : vector<8x128xi32>
    %c0_35 = arith.constant 0 : index
    %c0_36 = arith.constant 0 : index
    %c1_37 = arith.constant 1 : index
    %c0_38 = arith.constant 0 : index
    %c0_39 = arith.constant 0 : index
    %54 = vector.load %arg4[%c0_35, %c0_36, %c1_37, %c0_38, %c0_39] : memref<1x2x3x8x128xf32, #tpu.memory_space<vmem>>, vector<1x1x1x8x128xf32>
    %55 = vector.shape_cast %54 : vector<1x1x1x8x128xf32> to vector<8x128xf32>
    %56 = arith.andi %53, %32 : vector<8x128xi1>
    %57 = arith.extui %56 : vector<8x128xi1> to vector<8x128xi32>
    %58 = arith.sitofp %57 : vector<8x128xi32> to vector<8x128xf32>
    %59 = arith.addf %55, %58 : vector<8x128xf32>
    %c0_40 = arith.constant 0 : index
    %c0_41 = arith.constant 0 : index
    %c1_42 = arith.constant 1 : index
    %c0_43 = arith.constant 0 : index
    %c0_44 = arith.constant 0 : index
    %60 = vector.load %arg4[%c0_40, %c0_41, %c1_42, %c0_43, %c0_44] : memref<1x2x3x8x128xf32, #tpu.memory_space<vmem>>, vector<1x1x1x8x128xf32>
    %61 = vector.shape_cast %60 : vector<1x1x1x8x128xf32> to vector<8x128xf32>
    %62 = vector.shape_cast %59 : vector<8x128xf32> to vector<1x1x1x8x128xf32>
    tpu.vector_store %arg4[%c0_40, %c0_41, %c1_42, %c0_43, %c0_44], %62 {strides = array<i32>} : memref<1x2x3x8x128xf32, #tpu.memory_space<vmem>>, vector<1x1x1x8x128xf32>,
    %c0_45 = arith.constant 0 : index
    %c1_46 = arith.constant 1 : index
    %c1_47 = arith.constant 1 : index
    %c0_48 = arith.constant 0 : index
    %c0_49 = arith.constant 0 : index
    %63 = vector.load %arg4[%c0_45, %c1_46, %c1_47, %c0_48, %c0_49] : memref<1x2x3x8x128xf32, #tpu.memory_space<vmem>>, vector<1x1x1x8x128xf32>
    %64 = vector.shape_cast %63 : vector<1x1x1x8x128xf32> to vector<8x128xf32>
    %65 = arith.extui %53 : vector<8x128xi1> to vector<8x128xi32>
    %66 = arith.sitofp %65 : vector<8x128xi32> to vector<8x128xf32>
    %67 = arith.addf %64, %66 : vector<8x128xf32>
    %c0_50 = arith.constant 0 : index
    %c1_51 = arith.constant 1 : index
    %c1_52 = arith.constant 1 : index
    %c0_53 = arith.constant 0 : index
    %c0_54 = arith.constant 0 : index
    %68 = vector.load %arg4[%c0_50, %c1_51, %c1_52, %c0_53, %c0_54] : memref<1x2x3x8x128xf32, #tpu.memory_space<vmem>>, vector<1x1x1x8x128xf32>
    %69 = vector.shape_cast %68 : vector<1x1x1x8x128xf32> to vector<8x128xf32>
    %70 = vector.shape_cast %67 : vector<8x128xf32> to vector<1x1x1x8x128xf32>
    tpu.vector_store %arg4[%c0_50, %c1_51, %c1_52, %c0_53, %c0_54], %70 {strides = array<i32>} : memref<1x2x3x8x128xf32, #tpu.memory_space<vmem>>, vector<1x1x1x8x128xf32>,
    %c3_i32_55 = arith.constant 3 : i32
    %71 = vector.broadcast %c3_i32_55 : i32 to vector<8x128xi32>
    %72 = arith.cmpi eq, %7, %71 : vector<8x128xi32>
    %c0_56 = arith.constant 0 : index
    %c0_57 = arith.constant 0 : index
    %c2_58 = arith.constant 2 : index
    %c0_59 = arith.constant 0 : index
    %c0_60 = arith.constant 0 : index
    %73 = vector.load %arg4[%c0_56, %c0_57, %c2_58, %c0_59, %c0_60] : memref<1x2x3x8x128xf32, #tpu.memory_space<vmem>>, vector<1x1x1x8x128xf32>
    %74 = vector.shape_cast %73 : vector<1x1x1x8x128xf32> to vector<8x128xf32>
    %75 = arith.andi %72, %32 : vector<8x128xi1>
    %76 = arith.extui %75 : vector<8x128xi1> to vector<8x128xi32>
    %77 = arith.sitofp %76 : vector<8x128xi32> to vector<8x128xf32>
    %78 = arith.addf %74, %77 : vector<8x128xf32>
    %c0_61 = arith.constant 0 : index
    %c0_62 = arith.constant 0 : index
    %c2_63 = arith.constant 2 : index
    %c0_64 = arith.constant 0 : index
    %c0_65 = arith.constant 0 : index
    %79 = vector.load %arg4[%c0_61, %c0_62, %c2_63, %c0_64, %c0_65] : memref<1x2x3x8x128xf32, #tpu.memory_space<vmem>>, vector<1x1x1x8x128xf32>
    %80 = vector.shape_cast %79 : vector<1x1x1x8x128xf32> to vector<8x128xf32>
    %81 = vector.shape_cast %78 : vector<8x128xf32> to vector<1x1x1x8x128xf32>
    tpu.vector_store %arg4[%c0_61, %c0_62, %c2_63, %c0_64, %c0_65], %81 {strides = array<i32>} : memref<1x2x3x8x128xf32, #tpu.memory_space<vmem>>, vector<1x1x1x8x128xf32>,
    %c0_66 = arith.constant 0 : index
    %c1_67 = arith.constant 1 : index
    %c2_68 = arith.constant 2 : index
    %c0_69 = arith.constant 0 : index
    %c0_70 = arith.constant 0 : index
    %82 = vector.load %arg4[%c0_66, %c1_67, %c2_68, %c0_69, %c0_70] : memref<1x2x3x8x128xf32, #tpu.memory_space<vmem>>, vector<1x1x1x8x128xf32>
    %83 = vector.shape_cast %82 : vector<1x1x1x8x128xf32> to vector<8x128xf32>
    %84 = arith.extui %72 : vector<8x128xi1> to vector<8x128xi32>
    %85 = arith.sitofp %84 : vector<8x128xi32> to vector<8x128xf32>
    %86 = arith.addf %83, %85 : vector<8x128xf32>
    %c0_71 = arith.constant 0 : index
    %c1_72 = arith.constant 1 : index
    %c2_73 = arith.constant 2 : index
    %c0_74 = arith.constant 0 : index
    %c0_75 = arith.constant 0 : index
    %87 = vector.load %arg4[%c0_71, %c1_72, %c2_73, %c0_74, %c0_75] : memref<1x2x3x8x128xf32, #tpu.memory_space<vmem>>, vector<1x1x1x8x128xf32>
    %88 = vector.shape_cast %87 : vector<1x1x1x8x128xf32> to vector<8x128xf32>
    %89 = vector.shape_cast %86 : vector<8x128xf32> to vector<1x1x1x8x128xf32>
    tpu.vector_store %arg4[%c0_71, %c1_72, %c2_73, %c0_74, %c0_75], %89 {strides = array<i32>} : memref<1x2x3x8x128xf32, #tpu.memory_space<vmem>>, vector<1x1x1x8x128xf32>,
    %c1_i32_76 = arith.constant 1 : i32
    return
  }
  func.func @transform_0(%arg0: i32, %arg1: i32) -> (i32, i32, i32, i32) {
    %c0_i32 = arith.constant 0 : i32
    %c0_i32_0 = arith.constant 0 : i32
    %c0_i32_1 = arith.constant 0 : i32
    return %arg0, %c0_i32, %arg1, %c0_i32_0 : i32, i32, i32, i32
  }
  func.func @transform_1(%arg0: i32, %arg1: i32) -> (i32, i32, i32) {
    %c0_i32 = arith.constant 0 : i32
    %c0_i32_0 = arith.constant 0 : i32
    return %arg0, %arg1, %c0_i32 : i32, i32, i32
  }
  func.func @transform_2(%arg0: i32, %arg1: i32) -> (i32, i32, i32, i32, i32) {
    %c0_i32 = arith.constant 0 : i32
    %c0_i32_0 = arith.constant 0 : i32
    %c0_i32_1 = arith.constant 0 : i32
    %c0_i32_2 = arith.constant 0 : i32
    %c0_i32_3 = arith.constant 0 : i32
    return %arg0, %c0_i32, %c0_i32_0, %c0_i32_1, %c0_i32_2 : i32, i32, i32, i32, i32
  }
}

</mosaic_0001>

<llo_original>
// kernel: tpu_custom_call.1
$region0: #{tpu_custom_call.1}
  #allocation0 [shape = 'u32[]', space=smem, size = 0x4, offset = 0x4, fixed_abs, tag = 'smem constant byte address 0x4 - core index']
  #allocation1 [shape = 'u32[144,128]{1,0:T(1,128)}', space=vmem, size = 0x12000, scoped, tag = 'internal scratch']
  %s0 = inlined_call_operand.hbm [shape: f32[2,4,8,128], index: 0, kind: input, shape index: {}]
  %s1 = inlined_call_operand.hbm [shape: s32[2,8,128], index: 1, kind: input, shape index: {}]
  %s2 = inlined_call_operand.hbm [shape: f32[2,2,3,8,128], index: 2, kind: output, shape index: {}]
  %s3 = sld [smem:[#allocation0]]
  $region53: #{tpu_custom_call.1} parent=0
    _
  %s5 = ssub.s32 1, %s3
  %s6 = scalar_select 0, %s5, %s3
  $region1: #{tpu_custom_call.1} parent=0
    #allocation2 [shape = 'u8[32768]{0}', space=vmem, size = 0x8000, scoped, tag = 'input window, operand 0']
    #allocation3 [shape = 's32[2]{0}', space=sflag, size = 0x8, scoped, tag = 'scoped memory for tpu_custom_call.1']
    #allocation4 [shape = 's32[2]{0}', space=sflag, size = 0x8, scoped, tag = 'scoped memory for tpu_custom_call.1']
    #allocation5 [shape = 'u8[8192]{0}', space=vmem, size = 0x2000, scoped, tag = 'input window, operand 1']
    #allocation6 [shape = 's32[2]{0}', space=sflag, size = 0x8, scoped, tag = 'scoped memory for tpu_custom_call.1']
    #allocation7 [shape = 'u8[49152]{0}', space=vmem, size = 0xc000, scoped, tag = 'output window, operand 0']
    %7 = vsyncpa [#allocation3], 0
    %s8 = scalar_lea.sflag [#allocation3], 1
    %9 = vsyncpa %s8, 0
    %10 = vsyncpa [#allocation6], 0
    %s11 = scalar_lea.sflag [#allocation6], 1
    %12 = vsyncpa %s11, 0
    %13 = vsyncpa [#allocation4], 0
    %s14 = scalar_lea.sflag [#allocation4], 1
    %15 = vsyncpa %s14, 0
    loop: start=0, step=1, limit=4
    $region2: #{tpu_custom_call.1} parent=1 // loop_pre_header
      _
    $region3: #{tpu_custom_call.1} parent=1 // loop_header
      %s17 = sphi 0, %s21
      %p18 = scmp.ge.s32.totalorder %s17, 4
      %s24 = sphi 0, %s36
      %s25 = sphi 0, %s32
      %s26 = sphi 0, %s24
      %s27 = sphi 0, %s25
      %s28 = sphi 0, %s26
      %s29 = sphi 0, %s27
      %s41 = sphi 0, %s43
      %s44 = sphi 0, %s41
      %s45 = sphi 0, %s44
      %s61 = sphi 0, %s45
      %s69 = sphi 0, %s71
      %s72 = sphi 0, %s69
      %s73 = sphi 0, %s72
      %s89 = sphi 0, %s73
      %s95 = sphi 0, %s97
      %s98 = sphi 0, %s95
      %s99 = sphi 0, %s98
      %s115 = sphi 0, %s99
    $region4: #{tpu_custom_call.1} parent=1 // loop_header_branch
      %20 = sbr.rel (%p18) target = $region8
    $region5: #{tpu_custom_call.1} parent=1 // loop_body
      %s22 = ssub.s32 %s17, 1
      %s23 = ssub.s32 %s17, 2
      %s30 = sadd.s32 1, %s25
      %p31 = scmp.ge.s32.totalorder %s30, 1
      %s32 = scalar_select %p31, 0, %s30
      %s33 = sadd.s32 1, %s24
      %s34 = scalar_select %p31, %s33, %s24
      %p35 = scmp.ge.s32.totalorder %s34, 2
      %s36 = scalar_select %p35, 0, %s34
      %s37 = ssub.s32 %s24, %s36
      %s38 = ssub.s32 %s25, %s32
      %s39 = sor.u32 %s37, %s38
      %p40 = scmp.eq.s32.totalorder %s39, 0
      %s42 = sadd.s32 %s41, 1
      %s43 = scalar_select %p40, %s41, %s42
      %p46 = pneg %p40
      %p47 = scmp.eq.s32.totalorder %s17, 1
      %p48 = por %p46, %p47
      %p49 = scmp.ne.s32.totalorder %s41, %s44
      %p50 = scmp.eq.s32.totalorder %s17, 0
      %p51 = por %p49, %p50
      %p52 = scmp.ne.s32.totalorder %s41, %s44
      %p53 = scmp.eq.s32.totalorder %s22, 1
      %p54 = por %p52, %p53
      %p55 = scmp.ne.s32.totalorder %s44, %s45
      %p56 = scmp.eq.s32.totalorder %s22, 0
      %p57 = por %p55, %p56
      %p58 = scmp.ne.s32.totalorder %s44, %s45
      %p59 = scmp.eq.s32.totalorder %s23, 1
      %p60 = por %p58, %p59
      %p62 = scmp.ne.s32.totalorder %s45, %s61
      %p63 = scmp.eq.s32.totalorder %s23, 0
      %p64 = por %p62, %p63
      %s65 = ssub.s32 %s24, %s36
      %s66 = ssub.s32 %s25, %s32
      %s67 = sor.u32 %s65, %s66
      %p68 = scmp.eq.s32.totalorder %s67, 0
      %s70 = sadd.s32 %s69, 1
      %s71 = scalar_select %p68, %s69, %s70
      %p74 = pneg %p68
      %p75 = scmp.eq.s32.totalorder %s17, 1
      %p76 = por %p74, %p75
      %p77 = scmp.ne.s32.totalorder %s69, %s72
      %p78 = scmp.eq.s32.totalorder %s17, 0
      %p79 = por %p77, %p78
      %p80 = scmp.ne.s32.totalorder %s69, %s72
      %p81 = scmp.eq.s32.totalorder %s22, 1
      %p82 = por %p80, %p81
      %p83 = scmp.ne.s32.totalorder %s72, %s73
      %p84 = scmp.eq.s32.totalorder %s22, 0
      %p85 = por %p83, %p84
      %p86 = scmp.ne.s32.totalorder %s72, %s73
      %p87 = scmp.eq.s32.totalorder %s23, 1
      %p88 = por %p86, %p87
      %p90 = scmp.ne.s32.totalorder %s73, %s89
      %p91 = scmp.eq.s32.totalorder %s23, 0
      %p92 = por %p90, %p91
      %s93 = ssub.s32 %s24, %s36
      %p94 = scmp.eq.s32.totalorder %s93, 0
      %s96 = sadd.s32 %s95, 1
      %s97 = scalar_select %p94, %s95, %s96
      %p100 = pneg %p94
      %p101 = scmp.eq.s32.totalorder %s17, 1
      %p102 = por %p100, %p101
      %p103 = scmp.ne.s32.totalorder %s95, %s98
      %p104 = scmp.eq.s32.totalorder %s17, 0
      %p105 = por %p103, %p104
      %p106 = scmp.ne.s32.totalorder %s95, %s98
      %p107 = scmp.eq.s32.totalorder %s22, 1
      %p108 = por %p106, %p107
      %p109 = scmp.ne.s32.totalorder %s98, %s99
      %p110 = scmp.eq.s32.totalorder %s22, 0
      %p111 = por %p109, %p110
      %p112 = scmp.ne.s32.totalorder %s98, %s99
      %p113 = scmp.eq.s32.totalorder %s23, 1
      %p114 = por %p112, %p113
      %p116 = scmp.ne.s32.totalorder %s99, %s115
      %p117 = scmp.eq.s32.totalorder %s23, 0
      %p118 = por %p116, %p117
      %p119 = scmp.le.s32.totalorder 1, %s17
      %p120 = scmp.lt.s32.totalorder %s17, 3
      %p121 = pnand %p119, %p120
      %p122 = pneg %p121
      // Predicated region
      $region9: #{tpu_custom_call.1} parent=5 // pred_check
        _
      $region10: #{tpu_custom_call.1} parent=5 // pred_check_branch
        %124 = sbr.rel (%p121) target = $region12
      $region11: #{tpu_custom_call.1} parent=5 // pred_region
        %s125 = ssub.s32 %s17, 1
      $region12: #{tpu_custom_call.1} parent=5 // pred_fallthru
        _
      %p126 = scmp.lt.s32.totalorder %s17, 2
      // Predicated region
      $region13: #{tpu_custom_call.1} parent=5 // pred_check
        %p127 = pneg %p126
      $region14: #{tpu_custom_call.1} parent=5 // pred_check_branch
        %129 = sbr.rel (%p127) target = $region16
      $region15: #{tpu_custom_call.1} parent=5 // pred_region
        // Predicated region
        $region17: #{tpu_custom_call.1} parent=15 // pred_check
          %p130 = pneg %p51
        $region18: #{tpu_custom_call.1} parent=15 // pred_check_branch
          %132 = sbr.rel (%p130) target = $region20
        $region19: #{tpu_custom_call.1} parent=15 // pred_region
          %s133 = sand.u32 %s41, 1
          %s134 = scalar_lea.sflag [#allocation3], %s133
          %s135 = sand.u32 %s41, 1
          %s136 = smul.addr %s135, 32
          %s137 = scalar_lea.vmem [#allocation2], %s136
          %s139 = ssub.s32 512, 512
          %140 = vsyncadd %s134, %s139
          %s141 = smul.addr %s24, 4
          %s142 = sadd.s32 %s25, %s141
          %s143 = smul.addr %s142, 128
          %s144 = scalar_lea.hbm %s0, %s143
          %s145 = sshll.u32 %s137, 4
          %s146 = int_to_ptr.vmem [resolvable:$true] %s145
          %151 = dma.hbm_to_vmem [thread:$0]  %s144, 512, %s146, %s134, 128, 128, 8
        $region20: #{tpu_custom_call.1} parent=15 // pred_fallthru
          _
        // Predicated region
        $region21: #{tpu_custom_call.1} parent=15 // pred_check
          %p152 = pneg %p79
        $region22: #{tpu_custom_call.1} parent=15 // pred_check_branch
          %154 = sbr.rel (%p152) target = $region24
        $region23: #{tpu_custom_call.1} parent=15 // pred_region
          %s155 = sand.u32 %s69, 1
          %s156 = scalar_lea.sflag [#allocation6], %s155
          %s157 = sand.u32 %s69, 1
          %s158 = smul.addr %s157, 8
          %s159 = scalar_lea.vmem [#allocation5], %s158
          %s161 = ssub.s32 128, 128
          %162 = vsyncadd %s156, %s161
          %s163 = sadd.s32 %s25, %s24
          %s164 = smul.addr %s163, 128
          %s165 = scalar_lea.hbm %s1, %s164
          %s167 = sshll.u32 %s159, 4
          %s168 = int_to_ptr.vmem [resolvable:$true] %s167
          %170 = dma.hbm_to_vmem [thread:$0]  %s165, 128, %s168, %s156
        $region24: #{tpu_custom_call.1} parent=15 // pred_fallthru
          _
      $region16: #{tpu_custom_call.1} parent=5 // pred_fallthru
        _
      %p171 = scmp.le.s32.totalorder 1, %s17
      %p172 = scmp.lt.s32.totalorder %s17, 3
      %p173 = pnand %p171, %p172
      %p174 = pneg %p173
      // Predicated region
      $region25: #{tpu_custom_call.1} parent=5 // pred_check
        _
      $region26: #{tpu_custom_call.1} parent=5 // pred_check_branch
        %176 = sbr.rel (%p173) target = $region28
      $region27: #{tpu_custom_call.1} parent=5 // pred_region
        %s177 = ssub.s32 %s17, 1
        %s178 = sand.u32 %s44, 1
        %s179 = scalar_lea.sflag [#allocation3], %s178
        %s180 = sand.u32 %s44, 1
        %s181 = smul.addr %s180, 32
        %s182 = scalar_lea.vmem [#allocation2], %s181
        // Predicated region
        $region29: #{tpu_custom_call.1} parent=27 // pred_check
          %p183 = pneg %p57
        $region30: #{tpu_custom_call.1} parent=27 // pred_check_branch
          %185 = sbr.rel (%p183) target = $region32
        $region31: #{tpu_custom_call.1} parent=27 // pred_region
          %186 = dma.done %s179, 512
        $region32: #{tpu_custom_call.1} parent=27 // pred_fallthru
          _
        %s187 = sand.u32 %s72, 1
        %s188 = scalar_lea.sflag [#allocation6], %s187
        %s189 = sand.u32 %s72, 1
        %s190 = smul.addr %s189, 8
        %s191 = scalar_lea.vmem [#allocation5], %s190
        // Predicated region
        $region33: #{tpu_custom_call.1} parent=27 // pred_check
          %p192 = pneg %p85
        $region34: #{tpu_custom_call.1} parent=27 // pred_check_branch
          %194 = sbr.rel (%p192) target = $region36
        $region35: #{tpu_custom_call.1} parent=27 // pred_region
          %195 = dma.done %s188, 128
        $region36: #{tpu_custom_call.1} parent=27 // pred_fallthru
          _
        %s196 = sand.u32 %s44, 1
        %s197 = scalar_lea.sflag [#allocation3], %s196
        %s198 = sand.u32 %s44, 1
        %s199 = smul.addr %s198, 32
        %s200 = scalar_lea.vmem [#allocation2], %s199
        %p201 = pneg %p57
        %p202 = pneg %p54
        %s203 = sand.u32 %s72, 1
        %s204 = scalar_lea.sflag [#allocation6], %s203
        %s205 = sand.u32 %s72, 1
        %s206 = smul.addr %s205, 8
        %s207 = scalar_lea.vmem [#allocation5], %s206
        %p208 = pneg %p85
        %p209 = pneg %p82
        %p210 = pneg %p111
        %p211 = pneg %p108
        %s212 = sand.u32 %s98, 1
        %s213 = scalar_lea.sflag [#allocation4], %s212
        %s214 = sand.u32 %s98, 1
        %s215 = smul.addr %s214, 48
        %s216 = scalar_lea.vmem [#allocation7], %s215
        %p217 = scmp.eq.s32.totalorder %s27, 0
        // Predicated region
        $region37: #{tpu_custom_call.1} parent=27 // pred_check
          %p218 = pneg %p217
        $region38: #{tpu_custom_call.1} parent=27 // pred_check_branch
          %220 = sbr.rel (%p218) target = $region40
        $region39: #{tpu_custom_call.1} parent=27 // pred_region
          %221 = vst [vmem:[%s216] sm:$0xff] 0.0
          %222 = vst [vmem:[%s216 + $0x8] sm:$0xff] 0.0
          %223 = vst [vmem:[%s216 + $0x10] sm:$0xff] 0.0
          %224 = vst [vmem:[%s216 + $0x18] sm:$0xff] 0.0
          %225 = vst [vmem:[%s216 + $0x20] sm:$0xff] 0.0
          %226 = vst [vmem:[%s216 + $0x28] sm:$0xff] 0.0
        $region40: #{tpu_custom_call.1} parent=27 // pred_fallthru
          _
        %v227 = vld [vmem:[%s191] sm:$0xff]
        %v228 = vld [vmem:[%s182] sm:$0xff]
        %s229 = sadd.s32 0, 8
        %s230 = scalar_lea.vmem %s182, %s229 [#allocation2]
        %v231 = vld [vmem:[%s230] sm:$0xff]
        %vm232 = vcmp.gt.f32.partialorder %v231, %v228
        %v233 = vsel %vm232, %v231, %v228
        %v234 = vsel %vm232, 1, 0
        %s235 = sadd.s32 0, 16
        %s236 = scalar_lea.vmem %s182, %s235 [#allocation2]
        %v237 = vld [vmem:[%s236] sm:$0xff]
        %vm238 = vcmp.gt.f32.partialorder %v237, %v233
        %v239 = vsel %vm238, %v237, %v233
        %v240 = vsel %vm238, 2, %v234
        %s241 = sadd.s32 0, 24
        %s242 = scalar_lea.vmem %s182, %s241 [#allocation2]
        %v243 = vld [vmem:[%s242] sm:$0xff]
        %vm244 = vcmp.gt.f32.partialorder %v243, %v239
        %v245 = vsel %vm244, 3, %v240
        %vm246 = vcmp.eq.s32.totalorder %v245, %v227
        %vm247 = vcmp.eq.s32.totalorder %v227, 1
        %v248 = vld [vmem:[%s216] sm:$0xff]
        %vm249 = vmand %vm247, %vm246
        %v250 = vsel %vm249, 1, 0
        %v251 = vcvt.s32.f32 %v250
        %v252 = vadd.f32 %v248, %v251
        %253 = vst [vmem:[%s216] sm:$0xff] %v252
        %s254 = scalar_lea.vmem %s216, 24 [#allocation7]
        %v255 = vld [vmem:[%s254] sm:$0xff]
        %v256 = vsel %vm247, 1, 0
        %v257 = vcvt.s32.f32 %v256
        %v258 = vadd.f32 %v255, %v257
        %259 = vst [vmem:[%s254] sm:$0xff] %v258
        %vm260 = vcmp.eq.s32.totalorder %v227, 2
        %s261 = scalar_lea.vmem %s216, 8 [#allocation7]
        %v262 = vld [vmem:[%s261] sm:$0xff]
        %vm263 = vmand %vm260, %vm246
        %v264 = vsel %vm263, 1, 0
        %v265 = vcvt.s32.f32 %v264
        %v266 = vadd.f32 %v262, %v265
        %267 = vst [vmem:[%s261] sm:$0xff] %v266
        %s268 = scalar_lea.vmem %s216, 32 [#allocation7]
        %v269 = vld [vmem:[%s268] sm:$0xff]
        %v270 = vsel %vm260, 1, 0
        %v271 = vcvt.s32.f32 %v270
        %v272 = vadd.f32 %v269, %v271
        %273 = vst [vmem:[%s268] sm:$0xff] %v272
        %vm274 = vcmp.eq.s32.totalorder %v227, 3
        %s275 = scalar_lea.vmem %s216, 16 [#allocation7]
        %v276 = vld [vmem:[%s275] sm:$0xff]
        %vm277 = vmand %vm274, %vm246
        %v278 = vsel %vm277, 1, 0
        %v279 = vcvt.s32.f32 %v278
        %v280 = vadd.f32 %v276, %v279
        %281 = vst [vmem:[%s275] sm:$0xff] %v280
        %s282 = scalar_lea.vmem %s216, 40 [#allocation7]
        %v283 = vld [vmem:[%s282] sm:$0xff]
        %v284 = vsel %vm274, 1, 0
        %v285 = vcvt.s32.f32 %v284
        %v286 = vadd.f32 %v283, %v285
        %287 = vst [vmem:[%s282] sm:$0xff] %v286
        %s288 = sand.u32 %s98, 1
        %s289 = scalar_lea.sflag [#allocation4], %s288
        %s290 = sand.u32 %s98, 1
        %s291 = smul.addr %s290, 48
        %s292 = scalar_lea.vmem [#allocation7], %s291
        // Predicated region
        $region41: #{tpu_custom_call.1} parent=27 // pred_check
          %p293 = pneg %p108
        $region42: #{tpu_custom_call.1} parent=27 // pred_check_branch
          %295 = sbr.rel (%p293) target = $region44
        $region43: #{tpu_custom_call.1} parent=27 // pred_region
          %s297 = ssub.s32 768, 768
          %298 = vsyncadd %s289, %s297
          %s299 = smul.addr %s26, 6
          %s300 = smul.addr %s299, 128
          %s301 = scalar_lea.hbm %s2, %s300
          %s302 = sshll.u32 %s292, 4
          %s303 = int_to_ptr.vmem [resolvable:$true] %s302
          %308 = dma.vmem_to_hbm [thread:$0]  %s303, 768, %s301, %s289, 128, 128, 8
        $region44: #{tpu_custom_call.1} parent=27 // pred_fallthru
          _
      $region28: #{tpu_custom_call.1} parent=5 // pred_fallthru
        _
      %p309 = scmp.le.s32.totalorder 2, %s17
      // Predicated region
      $region45: #{tpu_custom_call.1} parent=5 // pred_check
        %p310 = pneg %p309
      $region46: #{tpu_custom_call.1} parent=5 // pred_check_branch
        %312 = sbr.rel (%p310) target = $region48
      $region47: #{tpu_custom_call.1} parent=5 // pred_region
        %s313 = ssub.s32 %s17, 2
        // Predicated region
        $region49: #{tpu_custom_call.1} parent=47 // pred_check
          %p314 = pneg %p114
        $region50: #{tpu_custom_call.1} parent=47 // pred_check_branch
          %316 = sbr.rel (%p314) target = $region52
        $region51: #{tpu_custom_call.1} parent=47 // pred_region
          %s317 = sand.u32 %s99, 1
          %s318 = scalar_lea.sflag [#allocation4], %s317
          %s319 = sand.u32 %s99, 1
          %s320 = smul.addr %s319, 48
          %s321 = scalar_lea.vmem [#allocation7], %s320
          %322 = dma.done %s318, 768
        $region52: #{tpu_custom_call.1} parent=47 // pred_fallthru
          _
      $region48: #{tpu_custom_call.1} parent=5 // pred_fallthru
        _
    $region6: #{tpu_custom_call.1} parent=1 // loop_footer
      %s21 = sadd.s32 1, %s17
    $region7: #{tpu_custom_call.1} parent=1 // loop_footer_branch
      %16 = sbr.rel target = $region3
    $region8: #{tpu_custom_call.1} parent=1 // loop_exit
      _
    %323 = vsyncpa [#allocation3], 1
    %s324 = scalar_lea.sflag [#allocation3], 1
    %325 = vsyncpa %s324, 1
    %326 = vsyncpa [#allocation6], 1
    %s327 = scalar_lea.sflag [#allocation6], 1
    %328 = vsyncpa %s327, 1
    %329 = vsyncpa [#allocation4], 1
    %s330 = scalar_lea.sflag [#allocation4], 1
    %331 = vsyncpa %s330, 1

</llo_original>
